<compile_context>
chip_gen: v7x
topology: tpu7x:2x2x1
jax: 0.10.0
libtpu: 0.0.40
codegen_flags: <defaults>
</compile_context>

<pallas_src>
import functools

import jax
import jax.numpy as jnp
from jax import lax
from jax.experimental import pallas as pl
from jax.experimental.pallas import tpu as pltpu

EPS = 1e-5  # nn.BatchNorm2d default


def _fused_resblock_kernel(x_ref, w_ref, gamma_ref, beta_ref, out_ref,
                           pad_sc, y_sc, xk_sc, sum_sc, sumsq_sc,
                           scale_sc, shift_sc, *, n_img, c, h, w):
    phase = pl.program_id(0)   # 0: conv + batch statistics, 1: BN/ReLU/residual apply
    n = pl.program_id(1)       # image index
    l = h * w                  # flat spatial length (multiple of 128 at tested shape)
    m = w + 1                  # zero margin on each side of the flat slab
    count = float(n_img * h * w)

    @pl.when(jnp.logical_and(phase == 0, n == 0))
    def _init():
        pad_sc[...] = jnp.zeros_like(pad_sc)      # zero the margins once; interiors overwritten
        sum_sc[...] = jnp.zeros_like(sum_sc)
        sumsq_sc[...] = jnp.zeros_like(sumsq_sc)

    @pl.when(phase == 0)
    def _conv_and_stats():
        # In-kernel padding: drop image n into the zeroed slab's interior.
        pad_sc[n, :, m:m + l] = x_ref[...]

        # Horizontal-wrap masks, generated in-kernel (no extra input DMA).
        col = lax.broadcasted_iota(jnp.int32, (1, l), 1) % w
        left_ok = (col != 0).astype(jnp.float32)         # kills wrap for kw == 0 taps
        right_ok = (col != (w - 1)).astype(jnp.float32)  # kills wrap for kw == 2 taps

        # Stack the 9 shifted tap views into a single (9*C, L) K-operand.
        for kh in range(3):
            for kw in range(3):
                t = kh * 3 + kw
                off = m + (kh - 1) * w + (kw - 1)
                sl = pad_sc[n, :, off:off + l]
                if kw == 0:
                    sl = sl * left_ok
                elif kw == 2:
                    sl = sl * right_ok
                xk_sc[t * c:(t + 1) * c, :] = sl

        # One MXU matmul per image: (C, 9C) @ (9C, L) -> (C, L).
        y = jnp.dot(w_ref[...], xk_sc[...], preferred_element_type=jnp.float32)
        y_sc[n] = y
        sum_sc[...] += jnp.sum(y, axis=1, keepdims=True)
        sumsq_sc[...] += jnp.sum(y * y, axis=1, keepdims=True)

    @pl.when(jnp.logical_and(phase == 1, n == 0))
    def _fold_bn():
        mean = sum_sc[...] / count
        var = jnp.maximum(sumsq_sc[...] / count - mean * mean, 0.0)  # biased var (training BN)
        scale = gamma_ref[...] * lax.rsqrt(var + EPS)
        scale_sc[...] = scale
        shift_sc[...] = beta_ref[...] - mean * scale

    @pl.when(phase == 1)
    def _apply():
        z = jnp.maximum(y_sc[n] * scale_sc[...] + shift_sc[...], 0.0)  # folded BN + ReLU
        out_ref[...] = pad_sc[n, :, m:m + l] + z   # residual add; lane-dense 128-aligned store


def residual_block(x_nchw, conv_w, bn_gamma, bn_beta):
    """x_nchw: (N, C, H, W) f32; conv_w: (C, C, 3, 3); bn_gamma/beta: (C,)."""
    n_img, c, h, w = x_nchw.shape
    l = h * w
    m = w + 1
    lp = l + 2 * m

    # Lane-dense layout: channels on sublanes, flat H*W on lanes (free NCHW reshape).
    x_flat = x_nchw.astype(jnp.float32).reshape(n_img, c, l)
    # (Cout, Cin, kh, kw) -> (Cout, 9*Cin) with K ordered as (tap, cin) to match the stack.
    w2 = jnp.transpose(conv_w.astype(jnp.float32), (0, 2, 3, 1)).reshape(c, 9 * c)
    gamma = bn_gamma.astype(jnp.float32).reshape(c, 1)
    beta = bn_beta.astype(jnp.float32).reshape(c, 1)

    kern = functools.partial(_fused_resblock_kernel, n_img=n_img, c=c, h=h, w=w)

    # x is only consumed during phase 0; keep its block index stationary in phase 1
    # so the pipeline does not re-fetch it from HBM (residual comes from the VMEM slab).
    x_idx = lambda p, n: ((1 - p) * n + p * (n_img - 1), 0, 0)

    out_flat = pl.pallas_call(
        kern,
        grid=(2, n_img),                      # (phase, image), phase-major iteration
        in_specs=[
            pl.BlockSpec((None, c, l), x_idx),                 # one image (C, H*W)
            pl.BlockSpec((c, 9 * c), lambda p, n: (0, 0)),     # fused tap weights
            pl.BlockSpec((c, 1), lambda p, n: (0, 0)),         # gamma
            pl.BlockSpec((c, 1), lambda p, n: (0, 0)),         # beta
        ],
        out_specs=pl.BlockSpec((None, c, l), lambda p, n: (n, 0, 0)),
        out_shape=jax.ShapeDtypeStruct((n_img, c, l), jnp.float32),
        scratch_shapes=[
            pltpu.VMEM((n_img, c, lp), jnp.float32),   # zero-margined input slabs (whole batch)
            pltpu.VMEM((n_img, c, l), jnp.float32),    # conv outputs (whole batch, never spilled)
            pltpu.VMEM((9 * c, l), jnp.float32),       # stacked K-operand for the fused matmul
            pltpu.VMEM((c, 1), jnp.float32),           # sum
            pltpu.VMEM((c, 1), jnp.float32),           # sumsq
            pltpu.VMEM((c, 1), jnp.float32),           # folded scale
            pltpu.VMEM((c, 1), jnp.float32),           # folded shift
        ],
        compiler_params=pltpu.CompilerParams(
            # Sequential grid: BN's cross-image reduction carries state across steps.
            dimension_semantics=("arbitrary", "arbitrary"),
            vmem_limit_bytes=32 * 1024 * 1024,         # safe on v5e/v6e/v7x
        ),
    )(x_flat, w2, gamma, beta)

    return out_flat.reshape(n_img, c, h, w)


def residual_block_ref(x, w, gamma, beta):
    """Pure-JAX reference mirroring the PyTorch forward (training-mode BN)."""
    y = lax.conv_general_dilated(
        x, w, window_strides=(1, 1), padding=((1, 1), (1, 1)),
        dimension_numbers=("NCHW", "OIHW", "NCHW"))
    mean = jnp.mean(y, axis=(0, 2, 3), keepdims=True)
    var = jnp.mean((y - mean) ** 2, axis=(0, 2, 3), keepdims=True)
    y_hat = (y - mean) / jnp.sqrt(var + EPS)
    z = jnp.maximum(y_hat * gamma.reshape(1, -1, 1, 1) + beta.reshape(1, -1, 1, 1), 0.0)
    return x + z


if __name__ == "__main__":
    N, C, H, W = 2, 4, 16, 16

    key = jax.random.PRNGKey(0)
    k_x, k_w = jax.random.split(key)

    # Deterministic init matching the module's __init__:
    #   kaiming_normal_(conv.weight, nonlinearity='relu'): std = sqrt(2 / fan_in)
    fan_in = C * 3 * 3
    conv_w = jax.random.normal(k_w, (C, C, 3, 3), dtype=jnp.float32) * jnp.sqrt(2.0 / fan_in)
    bn_gamma = jnp.full((C,), 0.5, dtype=jnp.float32)   # constant_(bn.weight, 0.5)
    bn_beta = jnp.zeros((C,), dtype=jnp.float32)        # zeros_(bn.bias)

    x = jax.random.normal(k_x, (N, C, H, W), dtype=jnp.float32)

    out = jax.jit(residual_block)(x, conv_w, bn_gamma, bn_beta)
    out = jax.block_until_ready(out)

    ref = residual_block_ref(x, conv_w, bn_gamma, bn_beta)
    assert out.shape == (N, C, H, W)
    assert jnp.allclose(out, ref, rtol=1e-4, atol=1e-4), float(jnp.max(jnp.abs(out - ref)))

    print("KERNEL_OK")
</pallas_src>

<mosaic_0001>
module attributes {stable_mosaic.version = 11 : i64} {
  func.func @_fused_resblock_kernel(%arg0: i32, %arg1: i32, %arg2: memref<1x4x256xf32, #tpu.memory_space<vmem>>, %arg3: memref<4x36xf32, #tpu.memory_space<vmem>>, %arg4: memref<4x1xf32, #tpu.memory_space<vmem>>, %arg5: memref<4x1xf32, #tpu.memory_space<vmem>>, %arg6: memref<1x4x256xf32, #tpu.memory_space<vmem>>, %arg7: memref<2x4x290xf32, #tpu.memory_space<vmem>>, %arg8: memref<2x4x256xf32, #tpu.memory_space<vmem>>, %arg9: memref<36x256xf32, #tpu.memory_space<vmem>>, %arg10: memref<4x1xf32, #tpu.memory_space<vmem>>, %arg11: memref<4x1xf32, #tpu.memory_space<vmem>>, %arg12: memref<4x1xf32, #tpu.memory_space<vmem>>, %arg13: memref<4x1xf32, #tpu.memory_space<vmem>>) attributes {dimension_semantics = [#tpu.dimension_semantics<arbitrary>, #tpu.dimension_semantics<arbitrary>], iteration_bounds = array<i64: 2, 2>, scalar_prefetch = 0 : i64, scratch_operands = 7 : i64, tpu.core_type = #tpu.core_type<tc>, window_params = [{transform_indices = @transform_0, window_bounds = array<i64: 1, 4, 256>}, {pipeline_mode = #tpu.pipeline_mode<synchronous>, transform_indices = @transform_1, window_bounds = array<i64: 4, 36>}, {pipeline_mode = #tpu.pipeline_mode<synchronous>, transform_indices = @transform_2, window_bounds = array<i64: 4, 1>}, {pipeline_mode = #tpu.pipeline_mode<synchronous>, transform_indices = @transform_3, window_bounds = array<i64: 4, 1>}, {transform_indices = @transform_4, window_bounds = array<i64: 1, 4, 256>}]} {
    %c0_i32 = arith.constant 0 : i32
    %0 = arith.cmpi eq, %arg0, %c0_i32 : i32
    %c0_i32_0 = arith.constant 0 : i32
    %1 = arith.cmpi eq, %arg1, %c0_i32_0 : i32
    %2 = arith.andi %0, %1 : i1
    %3 = arith.extui %2 : i1 to i32
    %c0_i32_1 = arith.constant 0 : i32
    %4 = arith.cmpi ne, %3, %c0_i32_1 : i32
    scf.if %4 {
      %cst = arith.constant 0.000000e+00 : f32
      %16 = vector.broadcast %cst : f32 to vector<2x4x290xf32>
      %c0 = arith.constant 0 : index
      %c0_8 = arith.constant 0 : index
      %c0_9 = arith.constant 0 : index
      %17 = vector.load %arg7[%c0, %c0_8, %c0_9] : memref<2x4x290xf32, #tpu.memory_space<vmem>>, vector<2x4x290xf32>
      tpu.vector_store %arg7[%c0, %c0_8, %c0_9], %16 {strides = array<i32>} : memref<2x4x290xf32, #tpu.memory_space<vmem>>, vector<2x4x290xf32>,
      %cst_10 = arith.constant 0.000000e+00 : f32
      %18 = vector.broadcast %cst_10 : f32 to vector<4x1xf32>
      %c0_11 = arith.constant 0 : index
      %c0_12 = arith.constant 0 : index
      %19 = vector.load %arg10[%c0_11, %c0_12] : memref<4x1xf32, #tpu.memory_space<vmem>>, vector<4x1xf32>
      tpu.vector_store %arg10[%c0_11, %c0_12], %18 {strides = array<i32>} : memref<4x1xf32, #tpu.memory_space<vmem>>, vector<4x1xf32>,
      %cst_13 = arith.constant 0.000000e+00 : f32
      %20 = vector.broadcast %cst_13 : f32 to vector<4x1xf32>
      %c0_14 = arith.constant 0 : index
      %c0_15 = arith.constant 0 : index
      %21 = vector.load %arg11[%c0_14, %c0_15] : memref<4x1xf32, #tpu.memory_space<vmem>>, vector<4x1xf32>
      tpu.vector_store %arg11[%c0_14, %c0_15], %20 {strides = array<i32>} : memref<4x1xf32, #tpu.memory_space<vmem>>, vector<4x1xf32>,
    } else {
    }
    %c0_i32_2 = arith.constant 0 : i32
    %5 = arith.cmpi eq, %arg0, %c0_i32_2 : i32
    %6 = arith.extui %5 : i1 to i32
    %c0_i32_3 = arith.constant 0 : i32
    %7 = arith.cmpi ne, %6, %c0_i32_3 : i32
    scf.if %7 {
      %c0 = arith.constant 0 : index
      %c0_8 = arith.constant 0 : index
      %c0_9 = arith.constant 0 : index
      %16 = vector.load %arg2[%c0, %c0_8, %c0_9] : memref<1x4x256xf32, #tpu.memory_space<vmem>>, vector<1x4x256xf32>
      %17 = vector.shape_cast %16 : vector<1x4x256xf32> to vector<4x256xf32>
      %18 = arith.index_cast %arg1 : i32 to index
      %c0_10 = arith.constant 0 : index
      %c17 = arith.constant 17 : index
      %19 = vector.load %arg7[%18, %c0_10, %c17] : memref<2x4x290xf32, #tpu.memory_space<vmem>>, vector<1x4x256xf32>
      %20 = vector.shape_cast %19 : vector<1x4x256xf32> to vector<4x256xf32>
      %21 = vector.shape_cast %17 : vector<4x256xf32> to vector<1x4x256xf32>
      tpu.vector_store %arg7[%18, %c0_10, %c17], %21 {strides = array<i32>} : memref<2x4x290xf32, #tpu.memory_space<vmem>>, vector<1x4x256xf32>,
      %22 = tpu.iota {dimensions = array<i32: 1>} : vector<1x256xi32>
      %c16_i32 = arith.constant 16 : i32
      %c0_i32_11 = arith.constant 0 : i32
      %23 = arith.cmpi eq, %c16_i32, %c0_i32_11 : i32
      %c1_i32_12 = arith.constant 1 : i32
      %24 = arith.select %23, %c1_i32_12, %c16_i32 : i32
      %25 = vector.broadcast %24 : i32 to vector<1x256xi32>
      %26 = arith.remsi %22, %25 : vector<1x256xi32>
      %c0_i32_13 = arith.constant 0 : i32
      %27 = vector.broadcast %c0_i32_13 : i32 to vector<1x256xi32>
      %28 = arith.cmpi ne, %26, %27 : vector<1x256xi32>
      %c0_i32_14 = arith.constant 0 : i32
      %29 = vector.broadcast %c0_i32_14 : i32 to vector<1x256xi32>
      %30 = arith.cmpi slt, %26, %29 : vector<1x256xi32>
      %c0_i32_15 = arith.constant 0 : i32
      %31 = arith.cmpi slt, %24, %c0_i32_15 : i32
      %32 = vector.broadcast %31 : i1 to vector<1x256xi1>
      %33 = vector.broadcast %32 : vector<1x256xi1> to vector<1x256xi1>
      %34 = arith.xori %30, %33 : vector<1x256xi1>
      %35 = arith.andi %34, %28 : vector<1x256xi1>
      %36 = vector.broadcast %24 : i32 to vector<1x256xi32>
      %37 = arith.addi %26, %36 : vector<1x256xi32>
      %38 = arith.select %35, %37, %26 : vector<1x256xi1>, vector<1x256xi32>
      %c0_i32_16 = arith.constant 0 : i32
      %39 = vector.broadcast %c0_i32_16 : i32 to vector<1x256xi32>
      %40 = arith.cmpi ne, %38, %39 : vector<1x256xi32>
      %41 = arith.extui %40 : vector<1x256xi1> to vector<1x256xi32>
      %42 = arith.sitofp %41 : vector<1x256xi32> to vector<1x256xf32>
      %c15_i32 = arith.constant 15 : i32
      %43 = vector.broadcast %c15_i32 : i32 to vector<1x256xi32>
      %44 = arith.cmpi ne, %38, %43 : vector<1x256xi32>
      %45 = arith.extui %44 : vector<1x256xi1> to vector<1x256xi32>
      %46 = arith.sitofp %45 : vector<1x256xi32> to vector<1x256xf32>
      %47 = arith.index_cast %arg1 : i32 to index
      %c0_17 = arith.constant 0 : index
      %c0_18 = arith.constant 0 : index
      %48 = vector.load %arg7[%47, %c0_17, %c0_18] : memref<2x4x290xf32, #tpu.memory_space<vmem>>, vector<1x4x256xf32>
      %49 = vector.shape_cast %48 : vector<1x4x256xf32> to vector<4x256xf32>
      %50 = vector.broadcast %42 : vector<1x256xf32> to vector<4x256xf32>
      %51 = arith.mulf %49, %50 : vector<4x256xf32>
      %c0_19 = arith.constant 0 : index
      %c0_20 = arith.constant 0 : index
      %52 = vector.load %arg9[%c0_19, %c0_20] : memref<36x256xf32, #tpu.memory_space<vmem>>, vector<4x256xf32>
      tpu.vector_store %arg9[%c0_19, %c0_20], %51 {strides = array<i32>} : memref<36x256xf32, #tpu.memory_space<vmem>>, vector<4x256xf32>,
      %53 = arith.index_cast %arg1 : i32 to index
      %c0_21 = arith.constant 0 : index
      %c1 = arith.constant 1 : index
      %54 = vector.load %arg7[%53, %c0_21, %c1] : memref<2x4x290xf32, #tpu.memory_space<vmem>>, vector<1x4x256xf32>
      %55 = vector.shape_cast %54 : vector<1x4x256xf32> to vector<4x256xf32>
      %c4 = arith.constant 4 : index
      %c0_22 = arith.constant 0 : index
      %56 = vector.load %arg9[%c4, %c0_22] : memref<36x256xf32, #tpu.memory_space<vmem>>, vector<4x256xf32>
      tpu.vector_store %arg9[%c4, %c0_22], %55 {strides = array<i32>} : memref<36x256xf32, #tpu.memory_space<vmem>>, vector<4x256xf32>,
      %57 = arith.index_cast %arg1 : i32 to index
      %c0_23 = arith.constant 0 : index
      %c2 = arith.constant 2 : index
      %58 = vector.load %arg7[%57, %c0_23, %c2] : memref<2x4x290xf32, #tpu.memory_space<vmem>>, vector<1x4x256xf32>
      %59 = vector.shape_cast %58 : vector<1x4x256xf32> to vector<4x256xf32>
      %60 = vector.broadcast %46 : vector<1x256xf32> to vector<4x256xf32>
      %61 = arith.mulf %59, %60 : vector<4x256xf32>
      %c8 = arith.constant 8 : index
      %c0_24 = arith.constant 0 : index
      %62 = vector.load %arg9[%c8, %c0_24] : memref<36x256xf32, #tpu.memory_space<vmem>>, vector<4x256xf32>
      tpu.vector_store %arg9[%c8, %c0_24], %61 {strides = array<i32>} : memref<36x256xf32, #tpu.memory_space<vmem>>, vector<4x256xf32>,
      %63 = arith.index_cast %arg1 : i32 to index
      %c0_25 = arith.constant 0 : index
      %c16 = arith.constant 16 : index
      %64 = vector.load %arg7[%63, %c0_25, %c16] : memref<2x4x290xf32, #tpu.memory_space<vmem>>, vector<1x4x256xf32>
      %65 = vector.shape_cast %64 : vector<1x4x256xf32> to vector<4x256xf32>
      %66 = vector.broadcast %42 : vector<1x256xf32> to vector<4x256xf32>
      %67 = arith.mulf %65, %66 : vector<4x256xf32>
      %c12 = arith.constant 12 : index
      %c0_26 = arith.constant 0 : index
      %68 = vector.load %arg9[%c12, %c0_26] : memref<36x256xf32, #tpu.memory_space<vmem>>, vector<4x256xf32>
      tpu.vector_store %arg9[%c12, %c0_26], %67 {strides = array<i32>} : memref<36x256xf32, #tpu.memory_space<vmem>>, vector<4x256xf32>,
      %69 = arith.index_cast %arg1 : i32 to index
      %c0_27 = arith.constant 0 : index
      %c17_28 = arith.constant 17 : index
      %70 = vector.load %arg7[%69, %c0_27, %c17_28] : memref<2x4x290xf32, #tpu.memory_space<vmem>>, vector<1x4x256xf32>
      %71 = vector.shape_cast %70 : vector<1x4x256xf32> to vector<4x256xf32>
      %c16_29 = arith.constant 16 : index
      %c0_30 = arith.constant 0 : index
      %72 = vector.load %arg9[%c16_29, %c0_30] : memref<36x256xf32, #tpu.memory_space<vmem>>, vector<4x256xf32>
      tpu.vector_store %arg9[%c16_29, %c0_30], %71 {strides = array<i32>} : memref<36x256xf32, #tpu.memory_space<vmem>>, vector<4x256xf32>,
      %73 = arith.index_cast %arg1 : i32 to index
      %c0_31 = arith.constant 0 : index
      %c18 = arith.constant 18 : index
      %74 = vector.load %arg7[%73, %c0_31, %c18] : memref<2x4x290xf32, #tpu.memory_space<vmem>>, vector<1x4x256xf32>
      %75 = vector.shape_cast %74 : vector<1x4x256xf32> to vector<4x256xf32>
      %76 = vector.broadcast %46 : vector<1x256xf32> to vector<4x256xf32>
      %77 = arith.mulf %75, %76 : vector<4x256xf32>
      %c20 = arith.constant 20 : index
      %c0_32 = arith.constant 0 : index
      %78 = vector.load %arg9[%c20, %c0_32] : memref<36x256xf32, #tpu.memory_space<vmem>>, vector<4x256xf32>
      tpu.vector_store %arg9[%c20, %c0_32], %77 {strides = array<i32>} : memref<36x256xf32, #tpu.memory_space<vmem>>, vector<4x256xf32>,
      %79 = arith.index_cast %arg1 : i32 to index
      %c0_33 = arith.constant 0 : index
      %c32 = arith.constant 32 : index
      %80 = vector.load %arg7[%79, %c0_33, %c32] : memref<2x4x290xf32, #tpu.memory_space<vmem>>, vector<1x4x256xf32>
      %81 = vector.shape_cast %80 : vector<1x4x256xf32> to vector<4x256xf32>
      %82 = vector.broadcast %42 : vector<1x256xf32> to vector<4x256xf32>
      %83 = arith.mulf %81, %82 : vector<4x256xf32>
      %c24 = arith.constant 24 : index
      %c0_34 = arith.constant 0 : index
      %84 = vector.load %arg9[%c24, %c0_34] : memref<36x256xf32, #tpu.memory_space<vmem>>, vector<4x256xf32>
      tpu.vector_store %arg9[%c24, %c0_34], %83 {strides = array<i32>} : memref<36x256xf32, #tpu.memory_space<vmem>>, vector<4x256xf32>,
      %85 = arith.index_cast %arg1 : i32 to index
      %c0_35 = arith.constant 0 : index
      %c33 = arith.constant 33 : index
      %86 = vector.load %arg7[%85, %c0_35, %c33] : memref<2x4x290xf32, #tpu.memory_space<vmem>>, vector<1x4x256xf32>
      %87 = vector.shape_cast %86 : vector<1x4x256xf32> to vector<4x256xf32>
      %c28 = arith.constant 28 : index
      %c0_36 = arith.constant 0 : index
      %88 = vector.load %arg9[%c28, %c0_36] : memref<36x256xf32, #tpu.memory_space<vmem>>, vector<4x256xf32>
      tpu.vector_store %arg9[%c28, %c0_36], %87 {strides = array<i32>} : memref<36x256xf32, #tpu.memory_space<vmem>>, vector<4x256xf32>,
      %89 = arith.index_cast %arg1 : i32 to index
      %c0_37 = arith.constant 0 : index
      %c34 = arith.constant 34 : index
      %90 = vector.load %arg7[%89, %c0_37, %c34] : memref<2x4x290xf32, #tpu.memory_space<vmem>>, vector<1x4x256xf32>
      %91 = vector.shape_cast %90 : vector<1x4x256xf32> to vector<4x256xf32>
      %92 = vector.broadcast %46 : vector<1x256xf32> to vector<4x256xf32>
      %93 = arith.mulf %91, %92 : vector<4x256xf32>
      %c32_38 = arith.constant 32 : index
      %c0_39 = arith.constant 0 : index
      %94 = vector.load %arg9[%c32_38, %c0_39] : memref<36x256xf32, #tpu.memory_space<vmem>>, vector<4x256xf32>
      tpu.vector_store %arg9[%c32_38, %c0_39], %93 {strides = array<i32>} : memref<36x256xf32, #tpu.memory_space<vmem>>, vector<4x256xf32>,
      %c0_40 = arith.constant 0 : index
      %c0_41 = arith.constant 0 : index
      %95 = vector.load %arg3[%c0_40, %c0_41] : memref<4x36xf32, #tpu.memory_space<vmem>>, vector<4x36xf32>
      %c0_42 = arith.constant 0 : index
      %c0_43 = arith.constant 0 : index
      %96 = vector.load %arg9[%c0_42, %c0_43] : memref<36x256xf32, #tpu.memory_space<vmem>>, vector<36x256xf32>
      %cst = arith.constant dense<0.000000e+00> : vector<4x256xf32>
      %97 = tpu.matmul %95, %96, %cst {dimension_numbers = #tpu.dot_dimension_numbers<[1], [0], [0], [1], [0, 0, 1, 1], [], []>} : vector<4x36xf32>, vector<36x256xf32>, vector<4x256xf32> -> vector<4x256xf32>
      %98 = arith.index_cast %arg1 : i32 to index
      %c0_44 = arith.constant 0 : index
      %c0_45 = arith.constant 0 : index
      %99 = vector.load %arg8[%98, %c0_44, %c0_45] : memref<2x4x256xf32, #tpu.memory_space<vmem>>, vector<1x4x256xf32>
      %100 = vector.shape_cast %99 : vector<1x4x256xf32> to vector<4x256xf32>
      %101 = vector.shape_cast %97 : vector<4x256xf32> to vector<1x4x256xf32>
      tpu.vector_store %arg8[%98, %c0_44, %c0_45], %101 {strides = array<i32>} : memref<2x4x256xf32, #tpu.memory_space<vmem>>, vector<1x4x256xf32>,
      %c0_46 = arith.constant 0 : index
      %c0_47 = arith.constant 0 : index
      %102 = vector.load %arg10[%c0_46, %c0_47] : memref<4x1xf32, #tpu.memory_space<vmem>>, vector<4x1xf32>
      %cst_48 = arith.constant dense<0.000000e+00> : vector<4xf32>
      %103 = vector.multi_reduction <add>, %97, %cst_48 [1] : vector<4x256xf32> to vector<4xf32>
      %104 = vector.shape_cast %103 : vector<4xf32> to vector<4x1xf32>
      %105 = arith.addf %102, %104 : vector<4x1xf32>
      %c0_49 = arith.constant 0 : index
      %c0_50 = arith.constant 0 : index
      %106 = vector.load %arg10[%c0_49, %c0_50] : memref<4x1xf32, #tpu.memory_space<vmem>>, vector<4x1xf32>
      tpu.vector_store %arg10[%c0_49, %c0_50], %105 {strides = array<i32>} : memref<4x1xf32, #tpu.memory_space<vmem>>, vector<4x1xf32>,
      %c0_51 = arith.constant 0 : index
      %c0_52 = arith.constant 0 : index
      %107 = vector.load %arg11[%c0_51, %c0_52] : memref<4x1xf32, #tpu.memory_space<vmem>>, vector<4x1xf32>
      %108 = arith.mulf %97, %97 : vector<4x256xf32>
      %cst_53 = arith.constant dense<0.000000e+00> : vector<4xf32>
      %109 = vector.multi_reduction <add>, %108, %cst_53 [1] : vector<4x256xf32> to vector<4xf32>
      %110 = vector.shape_cast %109 : vector<4xf32> to vector<4x1xf32>
      %111 = arith.addf %107, %110 : vector<4x1xf32>
      %c0_54 = arith.constant 0 : index
      %c0_55 = arith.constant 0 : index
      %112 = vector.load %arg11[%c0_54, %c0_55] : memref<4x1xf32, #tpu.memory_space<vmem>>, vector<4x1xf32>
      tpu.vector_store %arg11[%c0_54, %c0_55], %111 {strides = array<i32>} : memref<4x1xf32, #tpu.memory_space<vmem>>, vector<4x1xf32>,
    } else {
    }
    %c1_i32 = arith.constant 1 : i32
    %8 = arith.cmpi eq, %arg0, %c1_i32 : i32
    %c0_i32_4 = arith.constant 0 : i32
    %9 = arith.cmpi eq, %arg1, %c0_i32_4 : i32
    %10 = arith.andi %8, %9 : i1
    %11 = arith.extui %10 : i1 to i32
    %c0_i32_5 = arith.constant 0 : i32
    %12 = arith.cmpi ne, %11, %c0_i32_5 : i32
    scf.if %12 {
      %c0 = arith.constant 0 : index
      %c0_8 = arith.constant 0 : index
      %16 = vector.load %arg10[%c0, %c0_8] : memref<4x1xf32, #tpu.memory_space<vmem>>, vector<4x1xf32>
      %cst = arith.constant 5.120000e+02 : f32
      %17 = vector.broadcast %cst : f32 to vector<4x1xf32>
      %18 = arith.divf %16, %17 : vector<4x1xf32>
      %c0_9 = arith.constant 0 : index
      %c0_10 = arith.constant 0 : index
      %19 = vector.load %arg11[%c0_9, %c0_10] : memref<4x1xf32, #tpu.memory_space<vmem>>, vector<4x1xf32>
      %cst_11 = arith.constant 5.120000e+02 : f32
      %20 = vector.broadcast %cst_11 : f32 to vector<4x1xf32>
      %21 = arith.divf %19, %20 : vector<4x1xf32>
      %22 = arith.mulf %18, %18 : vector<4x1xf32>
      %23 = arith.subf %21, %22 : vector<4x1xf32>
      %cst_12 = arith.constant 0.000000e+00 : f32
      %24 = vector.broadcast %cst_12 : f32 to vector<4x1xf32>
      %25 = arith.maximumf %23, %24 : vector<4x1xf32>
      %c0_13 = arith.constant 0 : index
      %c0_14 = arith.constant 0 : index
      %26 = vector.load %arg4[%c0_13, %c0_14] : memref<4x1xf32, #tpu.memory_space<vmem>>, vector<4x1xf32>
      %cst_15 = arith.constant 9.99999974E-6 : f32
      %27 = vector.broadcast %cst_15 : f32 to vector<4x1xf32>
      %28 = arith.addf %25, %27 : vector<4x1xf32>
      %29 = math.rsqrt %28 : vector<4x1xf32>
      %30 = arith.mulf %26, %29 : vector<4x1xf32>
      %c0_16 = arith.constant 0 : index
      %c0_17 = arith.constant 0 : index
      %31 = vector.load %arg12[%c0_16, %c0_17] : memref<4x1xf32, #tpu.memory_space<vmem>>, vector<4x1xf32>
      tpu.vector_store %arg12[%c0_16, %c0_17], %30 {strides = array<i32>} : memref<4x1xf32, #tpu.memory_space<vmem>>, vector<4x1xf32>,
      %c0_18 = arith.constant 0 : index
      %c0_19 = arith.constant 0 : index
      %32 = vector.load %arg5[%c0_18, %c0_19] : memref<4x1xf32, #tpu.memory_space<vmem>>, vector<4x1xf32>
      %33 = arith.mulf %18, %30 : vector<4x1xf32>
      %34 = arith.subf %32, %33 : vector<4x1xf32>
      %c0_20 = arith.constant 0 : index
      %c0_21 = arith.constant 0 : index
      %35 = vector.load %arg13[%c0_20, %c0_21] : memref<4x1xf32, #tpu.memory_space<vmem>>, vector<4x1xf32>
      tpu.vector_store %arg13[%c0_20, %c0_21], %34 {strides = array<i32>} : memref<4x1xf32, #tpu.memory_space<vmem>>, vector<4x1xf32>,
    } else {
    }
    %c1_i32_6 = arith.constant 1 : i32
    %13 = arith.cmpi eq, %arg0, %c1_i32_6 : i32
    %14 = arith.extui %13 : i1 to i32
    %c0_i32_7 = arith.constant 0 : i32
    %15 = arith.cmpi ne, %14, %c0_i32_7 : i32
    scf.if %15 {
      %16 = arith.index_cast %arg1 : i32 to index
      %c0 = arith.constant 0 : index
      %c0_8 = arith.constant 0 : index
      %17 = vector.load %arg8[%16, %c0, %c0_8] : memref<2x4x256xf32, #tpu.memory_space<vmem>>, vector<1x4x256xf32>
      %18 = vector.shape_cast %17 : vector<1x4x256xf32> to vector<4x256xf32>
      %c0_9 = arith.constant 0 : index
      %c0_10 = arith.constant 0 : index
      %19 = vector.load %arg12[%c0_9, %c0_10] : memref<4x1xf32, #tpu.memory_space<vmem>>, vector<4x1xf32>
      %20 = vector.broadcast %19 : vector<4x1xf32> to vector<4x256xf32>
      %21 = arith.mulf %18, %20 : vector<4x256xf32>
      %c0_11 = arith.constant 0 : index
      %c0_12 = arith.constant 0 : index
      %22 = vector.load %arg13[%c0_11, %c0_12] : memref<4x1xf32, #tpu.memory_space<vmem>>, vector<4x1xf32>
      %23 = vector.broadcast %22 : vector<4x1xf32> to vector<4x256xf32>
      %24 = arith.addf %21, %23 : vector<4x256xf32>
      %cst = arith.constant 0.000000e+00 : f32
      %25 = vector.broadcast %cst : f32 to vector<4x256xf32>
      %26 = arith.maximumf %24, %25 : vector<4x256xf32>
      %27 = arith.index_cast %arg1 : i32 to index
      %c0_13 = arith.constant 0 : index
      %c17 = arith.constant 17 : index
      %28 = vector.load %arg7[%27, %c0_13, %c17] : memref<2x4x290xf32, #tpu.memory_space<vmem>>, vector<1x4x256xf32>
      %29 = vector.shape_cast %28 : vector<1x4x256xf32> to vector<4x256xf32>
      %30 = arith.addf %29, %26 : vector<4x256xf32>
      %c0_14 = arith.constant 0 : index
      %c0_15 = arith.constant 0 : index
      %c0_16 = arith.constant 0 : index
      %31 = vector.load %arg6[%c0_14, %c0_15, %c0_16] : memref<1x4x256xf32, #tpu.memory_space<vmem>>, vector<1x4x256xf32>
      %32 = vector.shape_cast %31 : vector<1x4x256xf32> to vector<4x256xf32>
      %33 = vector.shape_cast %30 : vector<4x256xf32> to vector<1x4x256xf32>
      tpu.vector_store %arg6[%c0_14, %c0_15, %c0_16], %33 {strides = array<i32>} : memref<1x4x256xf32, #tpu.memory_space<vmem>>, vector<1x4x256xf32>,
    } else {
    }
    return
  }
  func.func @transform_0(%arg0: i32, %arg1: i32) -> (i32, i32, i32) {
    %c1_i32 = arith.constant 1 : i32
    %0 = arith.subi %c1_i32, %arg0 : i32
    %1 = arith.muli %0, %arg1 : i32
    %c1_i32_0 = arith.constant 1 : i32
    %2 = arith.muli %arg0, %c1_i32_0 : i32
    %3 = arith.addi %1, %2 : i32
    %c0_i32 = arith.constant 0 : i32
    %c0_i32_1 = arith.constant 0 : i32
    %c0_i32_2 = arith.constant 0 : i32
    return %3, %c0_i32, %c0_i32_1 : i32, i32, i32
  }
  func.func @transform_1(%arg0: i32, %arg1: i32) -> (i32, i32) {
    %c0_i32 = arith.constant 0 : i32
    %c0_i32_0 = arith.constant 0 : i32
    %c0_i32_1 = arith.constant 0 : i32
    return %c0_i32, %c0_i32_0 : i32, i32
  }
  func.func @transform_2(%arg0: i32, %arg1: i32) -> (i32, i32) {
    %c0_i32 = arith.constant 0 : i32
    %c0_i32_0 = arith.constant 0 : i32
    %c0_i32_1 = arith.constant 0 : i32
    return %c0_i32, %c0_i32_0 : i32, i32
  }
  func.func @transform_3(%arg0: i32, %arg1: i32) -> (i32, i32) {
    %c0_i32 = arith.constant 0 : i32
    %c0_i32_0 = arith.constant 0 : i32
    %c0_i32_1 = arith.constant 0 : i32
    return %c0_i32, %c0_i32_0 : i32, i32
  }
  func.func @transform_4(%arg0: i32, %arg1: i32) -> (i32, i32, i32) {
    %c0_i32 = arith.constant 0 : i32
    %c0_i32_0 = arith.constant 0 : i32
    %c0_i32_1 = arith.constant 0 : i32
    return %arg1, %c0_i32, %c0_i32_0 : i32, i32, i32
  }
}

</mosaic_0001>

<llo_original>
// kernel: residual_block.1
$region0: #{residual_block.1}
  #allocation0 [shape = 'u32[]', space=smem, size = 0x4, offset = 0x4, fixed_abs, tag = 'smem constant byte address 0x4 - core index']
  #allocation1 [shape = 'u32[144,128]{1,0:T(1,128)}', space=vmem, size = 0x12000, scoped, tag = 'internal scratch']
  #allocation2 [shape = 'f32[2,4,290]{2,1,0:T(4,128)}', space=vmem, size = 0x3000, scoped, tag = 'scratch operand']
  #allocation3 [shape = 'f32[2,4,256]{2,1,0:T(4,128)}', space=vmem, size = 0x2000, scoped, tag = 'scratch operand']
  #allocation4 [shape = 'f32[36,256]{1,0:T(8,128)}', space=vmem, size = 0xa000, scoped, tag = 'scratch operand']
  #allocation5 [shape = 'f32[4,1]{1,0:T(4,128)}', space=vmem, size = 0x800, scoped, tag = 'scratch operand']
  #allocation6 [shape = 'f32[4,1]{1,0:T(4,128)}', space=vmem, size = 0x800, scoped, tag = 'scratch operand']
  #allocation7 [shape = 'f32[4,1]{1,0:T(4,128)}', space=vmem, size = 0x800, scoped, tag = 'scratch operand']
  #allocation8 [shape = 'f32[4,1]{1,0:T(4,128)}', space=vmem, size = 0x800, scoped, tag = 'scratch operand']
  %s0 = inlined_call_operand.vmem [shape: f32[2,4,256], index: 0, kind: input, shape index: {}]
  %s1 = inlined_call_operand.vmem [shape: f32[4,36], index: 1, kind: input, shape index: {}]
  %s2 = inlined_call_operand.vmem [shape: f32[4,1], index: 2, kind: input, shape index: {}]
  %s3 = inlined_call_operand.vmem [shape: f32[4,1], index: 3, kind: input, shape index: {}]
  %s4 = inlined_call_operand.vmem [shape: f32[2,4,256], index: 4, kind: output, shape index: {}]
  %s5 = sld [smem:[#allocation0]]
  $region65: #{residual_block.1} parent=0
    _
  %s7 = ssub.s32 1, %s5
  %s8 = scalar_select 0, %s7, %s5
  loop: start=0, step=1, limit=6
  $region2: #{residual_block.1} parent=0 // loop_pre_header
    _
  $region3: #{residual_block.1} parent=0 // loop_header
    %s10 = sphi 0, %s14
    %p11 = scmp.ge.s32.totalorder %s10, 6
    %s17 = sphi 0, %s29
    %s18 = sphi 0, %s25
    %s19 = sphi 0, %s17
    %s20 = sphi 0, %s18
    %s21 = sphi 0, %s19
    %s22 = sphi 0, %s20
    %s38 = sphi 0, %s40
    %s41 = sphi 0, %s38
    %s42 = sphi 0, %s41
    %s58 = sphi 0, %s42
    %s62 = sphi 0, %s62
    %s64 = sphi 0, %s62
    %s65 = sphi 0, %s64
    %s79 = sphi 0, %s65
    %s83 = sphi 0, %s83
    %s85 = sphi 0, %s83
    %s86 = sphi 0, %s85
    %s100 = sphi 0, %s86
    %s104 = sphi 0, %s104
    %s106 = sphi 0, %s104
    %s107 = sphi 0, %s106
    %s121 = sphi 0, %s107
    %s127 = sphi 0, %s129
    %s130 = sphi 0, %s127
    %s131 = sphi 0, %s130
    %s147 = sphi 0, %s131
  $region4: #{residual_block.1} parent=0 // loop_header_branch
    %13 = sbr.rel (%p11) target = $region8
  $region5: #{residual_block.1} parent=0 // loop_body
    %s15 = ssub.s32 %s10, 1
    %s16 = ssub.s32 %s10, 2
    %s23 = sadd.s32 1, %s18
    %p24 = scmp.ge.s32.totalorder %s23, 2
    %s25 = scalar_select %p24, 0, %s23
    %s26 = sadd.s32 1, %s17
    %s27 = scalar_select %p24, %s26, %s17
    %p28 = scmp.ge.s32.totalorder %s27, 2
    %s29 = scalar_select %p28, 0, %s27
    %s30 = ssub.s32 1, %s17
    %s31 = smul.u32 %s30, %s18
    %s32 = sadd.s32 %s31, %s17
    %s33 = ssub.s32 1, %s29
    %s34 = smul.u32 %s33, %s25
    %s35 = sadd.s32 %s34, %s29
    %s36 = ssub.s32 %s32, %s35
    %p37 = scmp.eq.s32.totalorder %s36, 0
    %s39 = sadd.s32 %s38, 1
    %s40 = scalar_select %p37, %s38, %s39
    %p43 = pneg %p37
    %p44 = scmp.eq.s32.totalorder %s10, 3
    %p45 = por %p43, %p44
    %p46 = scmp.ne.s32.totalorder %s38, %s41
    %p47 = scmp.eq.s32.totalorder %s10, 0
    %p48 = por %p46, %p47
    %p49 = scmp.ne.s32.totalorder %s38, %s41
    %p50 = scmp.eq.s32.totalorder %s15, 3
    %p51 = por %p49, %p50
    %p52 = scmp.ne.s32.totalorder %s41, %s42
    %p53 = scmp.eq.s32.totalorder %s15, 0
    %p54 = por %p52, %p53
    %p55 = scmp.ne.s32.totalorder %s41, %s42
    %p56 = scmp.eq.s32.totalorder %s16, 3
    %p57 = por %p55, %p56
    %p59 = scmp.ne.s32.totalorder %s42, %s58
    %p60 = scmp.eq.s32.totalorder %s16, 0
    %p61 = por %p59, %p60
    %s63 = sadd.s32 %s62, 1
    %p66 = scmp.eq.s32.totalorder %s10, 3
    %p67 = scmp.ne.s32.totalorder %s62, %s64
    %p68 = scmp.eq.s32.totalorder %s10, 0
    %p69 = por %p67, %p68
    %p70 = scmp.ne.s32.totalorder %s62, %s64
    %p71 = scmp.eq.s32.totalorder %s15, 3
    %p72 = por %p70, %p71
    %p73 = scmp.ne.s32.totalorder %s64, %s65
    %p74 = scmp.eq.s32.totalorder %s15, 0
    %p75 = por %p73, %p74
    %p76 = scmp.ne.s32.totalorder %s64, %s65
    %p77 = scmp.eq.s32.totalorder %s16, 3
    %p78 = por %p76, %p77
    %p80 = scmp.ne.s32.totalorder %s65, %s79
    %p81 = scmp.eq.s32.totalorder %s16, 0
    %p82 = por %p80, %p81
    %s84 = sadd.s32 %s83, 1
    %p87 = scmp.eq.s32.totalorder %s10, 3
    %p88 = scmp.ne.s32.totalorder %s83, %s85
    %p89 = scmp.eq.s32.totalorder %s10, 0
    %p90 = por %p88, %p89
    %p91 = scmp.ne.s32.totalorder %s83, %s85
    %p92 = scmp.eq.s32.totalorder %s15, 3
    %p93 = por %p91, %p92
    %p94 = scmp.ne.s32.totalorder %s85, %s86
    %p95 = scmp.eq.s32.totalorder %s15, 0
    %p96 = por %p94, %p95
    %p97 = scmp.ne.s32.totalorder %s85, %s86
    %p98 = scmp.eq.s32.totalorder %s16, 3
    %p99 = por %p97, %p98
    %p101 = scmp.ne.s32.totalorder %s86, %s100
    %p102 = scmp.eq.s32.totalorder %s16, 0
    %p103 = por %p101, %p102
    %s105 = sadd.s32 %s104, 1
    %p108 = scmp.eq.s32.totalorder %s10, 3
    %p109 = scmp.ne.s32.totalorder %s104, %s106
    %p110 = scmp.eq.s32.totalorder %s10, 0
    %p111 = por %p109, %p110
    %p112 = scmp.ne.s32.totalorder %s104, %s106
    %p113 = scmp.eq.s32.totalorder %s15, 3
    %p114 = por %p112, %p113
    %p115 = scmp.ne.s32.totalorder %s106, %s107
    %p116 = scmp.eq.s32.totalorder %s15, 0
    %p117 = por %p115, %p116
    %p118 = scmp.ne.s32.totalorder %s106, %s107
    %p119 = scmp.eq.s32.totalorder %s16, 3
    %p120 = por %p118, %p119
    %p122 = scmp.ne.s32.totalorder %s107, %s121
    %p123 = scmp.eq.s32.totalorder %s16, 0
    %p124 = por %p122, %p123
    %s125 = ssub.s32 %s18, %s25
    %p126 = scmp.eq.s32.totalorder %s125, 0
    %s128 = sadd.s32 %s127, 1
    %s129 = scalar_select %p126, %s127, %s128
    %p132 = pneg %p126
    %p133 = scmp.eq.s32.totalorder %s10, 3
    %p134 = por %p132, %p133
    %p135 = scmp.ne.s32.totalorder %s127, %s130
    %p136 = scmp.eq.s32.totalorder %s10, 0
    %p137 = por %p135, %p136
    %p138 = scmp.ne.s32.totalorder %s127, %s130
    %p139 = scmp.eq.s32.totalorder %s15, 3
    %p140 = por %p138, %p139
    %p141 = scmp.ne.s32.totalorder %s130, %s131
    %p142 = scmp.eq.s32.totalorder %s15, 0
    %p143 = por %p141, %p142
    %p144 = scmp.ne.s32.totalorder %s130, %s131
    %p145 = scmp.eq.s32.totalorder %s16, 3
    %p146 = por %p144, %p145
    %p148 = scmp.ne.s32.totalorder %s131, %s147
    %p149 = scmp.eq.s32.totalorder %s16, 0
    %p150 = por %p148, %p149
    %p151 = scmp.le.s32.totalorder 1, %s10
    %p152 = scmp.lt.s32.totalorder %s10, 5
    %p153 = pnand %p151, %p152
    %p154 = pneg %p153
    // Predicated region
    $region9: #{residual_block.1} parent=5 // pred_check
      _
    $region10: #{residual_block.1} parent=5 // pred_check_branch
      %156 = sbr.rel (%p153) target = $region12
    $region11: #{residual_block.1} parent=5 // pred_region
      %s157 = ssub.s32 %s10, 1
      // Predicated region
      $region13: #{residual_block.1} parent=11 // pred_check
        %p158 = pneg %p75
      $region14: #{residual_block.1} parent=11 // pred_check_branch
        %160 = sbr.rel (%p158) target = $region16
      $region15: #{residual_block.1} parent=11 // pred_region
        _
      $region16: #{residual_block.1} parent=11 // pred_fallthru
        _
      // Predicated region
      $region17: #{residual_block.1} parent=11 // pred_check
        %p161 = pneg %p96
      $region18: #{residual_block.1} parent=11 // pred_check_branch
        %163 = sbr.rel (%p161) target = $region20
      $region19: #{residual_block.1} parent=11 // pred_region
        _
      $region20: #{residual_block.1} parent=11 // pred_fallthru
        _
      // Predicated region
      $region21: #{residual_block.1} parent=11 // pred_check
        %p164 = pneg %p117
      $region22: #{residual_block.1} parent=11 // pred_check_branch
        %166 = sbr.rel (%p164) target = $region24
      $region23: #{residual_block.1} parent=11 // pred_region
        _
      $region24: #{residual_block.1} parent=11 // pred_fallthru
        _
    $region12: #{residual_block.1} parent=5 // pred_fallthru
      _
    %p167 = scmp.lt.s32.totalorder %s10, 4
    // Predicated region
    $region25: #{residual_block.1} parent=5 // pred_check
      %p168 = pneg %p167
    $region26: #{residual_block.1} parent=5 // pred_check_branch
      %170 = sbr.rel (%p168) target = $region28
    $region27: #{residual_block.1} parent=5 // pred_region
      // Predicated region
      $region29: #{residual_block.1} parent=27 // pred_check
        %p171 = pneg %p48
      $region30: #{residual_block.1} parent=27 // pred_check_branch
        %173 = sbr.rel (%p171) target = $region32
      $region31: #{residual_block.1} parent=27 // pred_region
        %s174 = ssub.s32 1, %s17
        %s175 = smul.u32 %s174, %s18
        %s176 = sadd.s32 %s175, %s17
        %p177 = scmp.lt.s32.totalorder %s176, 1
        %s178 = scalar_select %p177, %s176, 1
        %s179 = smul.addr %s178, 2
        %s180 = smul.addr %s179, 4
        %s181 = scalar_lea.vmem %s0, %s180
        %s182 = ssub.s32 1, %s17
        %s183 = smul.u32 %s182, %s18
        %s184 = sadd.s32 %s183, %s17
      $region32: #{residual_block.1} parent=27 // pred_fallthru
        _
    $region28: #{residual_block.1} parent=5 // pred_fallthru
      _
    %p185 = scmp.le.s32.totalorder 1, %s10
    %p186 = scmp.lt.s32.totalorder %s10, 5
    %p187 = pnand %p185, %p186
    %p188 = pneg %p187
    // Predicated region
    $region33: #{residual_block.1} parent=5 // pred_check
      _
    $region34: #{residual_block.1} parent=5 // pred_check_branch
      %190 = sbr.rel (%p187) target = $region36
    $region35: #{residual_block.1} parent=5 // pred_region
      %s191 = ssub.s32 %s10, 1
      %s192 = ssub.s32 1, %s19
      %s193 = smul.u32 %s192, %s20
      %s194 = sadd.s32 %s193, %s19
      %p195 = scmp.lt.s32.totalorder %s194, 1
      %s196 = scalar_select %p195, %s194, 1
      %s197 = smul.addr %s196, 2
      %s198 = smul.addr %s197, 4
      %s199 = scalar_lea.vmem %s0, %s198
      %p200 = pneg %p54
      %p201 = pneg %p51
      %p202 = pneg %p75
      %p203 = pneg %p72
      %p204 = pneg %p96
      %p205 = pneg %p93
      %p206 = pneg %p117
      %p207 = pneg %p114
      %p208 = pneg %p143
      %p209 = pneg %p140
      %p210 = scmp.lt.s32.totalorder %s20, 1
      %s211 = scalar_select %p210, %s20, 1
      %s212 = smul.addr %s211, 2
      %s213 = smul.addr %s212, 4
      %s214 = scalar_lea.vmem %s4, %s213
      %s215 = ssub.s32 1, %s19
      %s216 = smul.u32 %s215, %s20
      %s217 = sadd.s32 %s216, %s19
      %p218 = scmp.lt.s32.totalorder %s217, 1
      %s219 = scalar_select %p218, %s217, 1
      %s220 = smul.addr %s219, 2
      %s221 = smul.addr %s220, 4
      %s222 = scalar_lea.vmem %s0, %s221
      %s223 = ssub.s32 1, %s19
      %s224 = smul.u32 %s223, %s20
      %s225 = sadd.s32 %s224, %s19
      %p226 = scmp.lt.s32.totalorder %s20, 1
      %s227 = scalar_select %p226, %s20, 1
      %s228 = smul.addr %s227, 2
      %s229 = smul.addr %s228, 4
      %s230 = scalar_lea.vmem %s4, %s229
      %p231 = scmp.eq.s32.totalorder %s19, 0
      %p232 = scmp.eq.s32.totalorder %s20, 0
      %p233 = pnand %p231, %p232
      %p234 = pneg %p233
      // Predicated region
      $region37: #{residual_block.1} parent=35 // pred_check
        _
      $region38: #{residual_block.1} parent=35 // pred_check_branch
        %236 = sbr.rel (%p233) target = $region40
      $region39: #{residual_block.1} parent=35 // pred_region
        %237 = vst [vmem:[#allocation2] sm:$0xff] 0.0
        %vm238 = vcmask 273408
        %239 = vst.msk [vmem:[#allocation2 + $0x8] sm:$0xf] %vm238, 0.0
        %240 = vst [vmem:[#allocation2 + $0xc] sm:$0xff] 0.0
        %241 = vst.msk [vmem:[#allocation2 + $0x14] sm:$0xf] %vm238, 0.0
        %vm242 = vcmask 3072
        %243 = vst.msk [vmem:[#allocation5] sm:$0xf] %vm242, 0.0
        %244 = vst.msk [vmem:[#allocation6] sm:$0xf] %vm242, 0.0
      $region40: #{residual_block.1} parent=35 // pred_fallthru
        _
      // Predicated region
      $region41: #{residual_block.1} parent=35 // pred_check
        %p245 = pneg %p231
      $region42: #{residual_block.1} parent=35 // pred_check_branch
        %247 = sbr.rel (%p245) target = $region44
      $region43: #{residual_block.1} parent=35 // pred_region
        %v248 = vld [vmem:[%s222] sm:$0xff]
        %250 = vrot.lane.b32.xlu0 %v248, 17
        %v251 = vpop.permute.xlu0 %250
        %v252 = vrot.slane %v251, 4
        %vm253 = vcmask 138240
        %v254 = vsel %vm253, %v252, %v251
        %s257 = smul.u32 %s20, 3
        %s258 = smul.addr %s257, 4
        %s259 = scalar_lea.vmem [#allocation2], %s258
        %vm260 = vcmask 1043592
        %vm261 = vcmask 1047556
        %vm262 = vmor %vm261, %vm260
        %263 = vst.msk [vmem:[%s259] sm:$0xff] %vm262, %v254
        %vm264 = vcmask 134144
        %265 = vst.msk [vmem:[%s259 + $0x8] sm:$0xf] %vm264, %v252
        %v266 = vlaneseq
        %v267 = vand.u32 %v266, 127
        %v268 = vadd.s32 %v267, 128
        %vm269 = vcmp.lt.s32.totalorder %v267, 0
        %v270 = vsub.s32 0, %v267
        %v271 = vsel %vm269, %v270, %v267
        %v272 = vshrl.u32 %v271, 4
        %v273 = vand.u32 %v271, 15
        %v274 = vsub.s32 0, %v273
        %v275 = vsel %vm269, %v274, %v273
        %vm276 = vcmp.lt.s32.totalorder %v268, 0
        %v277 = vsub.s32 0, %v268
        %v278 = vsel %vm276, %v277, %v268
        %v279 = vshrl.u32 %v278, 4
        %v280 = vand.u32 %v278, 15
        %v281 = vsub.s32 0, %v280
        %v282 = vsel %vm276, %v281, %v280
        %vm283 = vcmp.ne.s32.totalorder %v275, 0
        %vm284 = vcmp.ne.s32.totalorder %v282, 0
        %vm285 = vcmp.lt.s32.totalorder %v275, 0
        %vm286 = vcmp.lt.s32.totalorder %v282, 0
        %vm287 = vmand %vm285, %vm283
        %vm288 = vmand %vm286, %vm284
        %v289 = vadd.s32 %v275, 16
        %v290 = vadd.s32 %v282, 16
        %v291 = vsel %vm287, %v289, %v275
        %v292 = vsel %vm288, %v290, %v282
        %vm293 = vcmp.ne.s32.totalorder %v291, 0
        %vm294 = vcmp.ne.s32.totalorder %v292, 0
        %v295 = vsel %vm293, 1, 0
        %v296 = vsel %vm294, 1, 0
        %v297 = vcvt.s32.f32 %v295
        %v298 = vcvt.s32.f32 %v296
        %vm299 = vcmp.ne.s32.totalorder %v291, 15
        %vm300 = vcmp.ne.s32.totalorder %v292, 15
        %v301 = vsel %vm299, 1, 0
        %v302 = vsel %vm300, 1, 0
        %v303 = vcvt.s32.f32 %v301
        %v304 = vcvt.s32.f32 %v302
        %v305 = vld [vmem:[%s259] sm:$0xff]
        %v308 = vcombine.low %v297, %v298
        %v310 = vmul.f32 %v305, %v308
        %v312 = vcombine.high %v310, %v310
        %314 = vst [vmem:[#allocation4] sm:$0xf] %v310
        %315 = vst [vmem:[#allocation4 + $0x8] sm:$0xf] %v312
        %v316 = vld [vmem:[%s259] sm:$0xff]
        %v317 = vld [vmem:[%s259 + $0x8] sm:$0xf]
        %v320 = vcombine.low %v316, %v316
        %v321 = vcombine.low %v317, %v317
        %322 = vrot.lane.b32.xlu0 %v320, 127
        %v323 = vpop.permute.xlu0 %322
        %324 = vrot.lane.b32.xlu0 %v316, 127
        %v325 = vpop.permute.xlu0 %324
        %326 = vrot.lane.b32.xlu0 %v321, 127
        %v327 = vpop.permute.xlu0 %326
        %vm328 = vcmask 1039360
        %v329 = vsel %vm328, %v323, %v325
        %v330 = vsel %vm328, %v325, %v327
        %333 = vst [vmem:[#allocation4] sm:$0xf0] %v329
        %334 = vst [vmem:[#allocation4 + $0x8] sm:$0xf0] %v330
        %v335 = vld [vmem:[%s259] sm:$0xff]
        %v336 = vld [vmem:[%s259 + $0x8] sm:$0xf]
        %v339 = vcombine.low %v303, %v304
        %340 = vrot.lane.b32.xlu0 %v339, 2
        %v341 = vpop.permute.xlu0 %340
        %v342 = vrot.slane %v341, 4
        %vm343 = vcmask 15360
        %v344 = vsel %vm343, %v342, %v341
        %v347 = vmul.f32 %v335, %v344
        %v348 = vmul.f32 %v336, %v342
        %v351 = vcombine.high %v347, %v347
        %352 = vrot.lane.b32.xlu0 %v347, 126
        %v353 = vpop.permute.xlu0 %352
        %354 = vrot.lane.b32.xlu0 %v351, 126
        %v355 = vpop.permute.xlu0 %354
        %356 = vrot.lane.b32.xlu0 %v348, 126
        %v357 = vpop.permute.xlu0 %356
        %vm358 = vcmask 1031168
        %v359 = vsel %vm358, %v353, %v355
        %v360 = vsel %vm358, %v355, %v357
        %363 = vst [vmem:[#allocation4 + $0x10] sm:$0xf] %v359
        %364 = vst [vmem:[#allocation4 + $0x18] sm:$0xf] %v360
        %v365 = vld [vmem:[%s259] sm:$0xff]
        %v366 = vld [vmem:[%s259 + $0x8] sm:$0xf]
        %367 = vrot.lane.b32.xlu0 %v308, 16
        %v368 = vpop.permute.xlu0 %367
        %v369 = vrot.slane %v368, 4
        %vm370 = vcmask 130048
        %v371 = vsel %vm370, %v369, %v368
        %v374 = vmul.f32 %v365, %v371
        %v375 = vmul.f32 %v366, %v369
        %v378 = vcombine.low %v374, %v374
        %v379 = vcombine.low %v375, %v375
        %380 = vrot.lane.b32.xlu0 %v378, 112
        %v381 = vpop.permute.xlu0 %380
        %382 = vrot.lane.b32.xlu0 %v374, 112
        %v383 = vpop.permute.xlu0 %382
        %384 = vrot.lane.b32.xlu0 %v379, 112
        %v385 = vpop.permute.xlu0 %384
        %vm386 = vcmask 916480
        %v387 = vsel %vm386, %v381, %v383
        %v388 = vsel %vm386, %v383, %v385
        %391 = vst [vmem:[#allocation4 + $0x10] sm:$0xf0] %v387
        %392 = vst [vmem:[#allocation4 + $0x18] sm:$0xf0] %v388
        %v393 = vld [vmem:[%s259] sm:$0xff]
        %v394 = vld [vmem:[%s259 + $0x8] sm:$0xf]
        %v397 = vcombine.high %v393, %v393
        %398 = vrot.lane.b32.xlu0 %v393, 111
        %v399 = vpop.permute.xlu0 %398
        %400 = vrot.lane.b32.xlu0 %v397, 111
        %v401 = vpop.permute.xlu0 %400
        %402 = vrot.lane.b32.xlu0 %v394, 111
        %v403 = vpop.permute.xlu0 %402
        %vm404 = vcmask 908288
        %v405 = vsel %vm404, %v399, %v401
        %v406 = vsel %vm404, %v401, %v403
        %409 = vst [vmem:[#allocation4 + $0x20] sm:$0xf] %v405
        %410 = vst [vmem:[#allocation4 + $0x28] sm:$0xf] %v406
        %v411 = vld [vmem:[%s259] sm:$0xff]
        %v412 = vld [vmem:[%s259 + $0x8] sm:$0xf]
        %413 = vrot.lane.b32.xlu0 %v339, 18
        %v414 = vpop.permute.xlu0 %413
        %v415 = vrot.slane %v414, 4
        %vm416 = vcmask 146432
        %v417 = vsel %vm416, %v415, %v414
        %v420 = vmul.f32 %v411, %v417
        %v421 = vmul.f32 %v412, %v415
        %v424 = vcombine.low %v420, %v420
        %v425 = vcombine.low %v421, %v421
        %426 = vrot.lane.b32.xlu0 %v424, 110
        %v427 = vpop.permute.xlu0 %426
        %428 = vrot.lane.b32.xlu0 %v420, 110
        %v429 = vpop.permute.xlu0 %428
        %430 = vrot.lane.b32.xlu0 %v425, 110
        %v431 = vpop.permute.xlu0 %430
        %vm432 = vcmask 900096
        %v433 = vsel %vm432, %v427, %v429
        %v434 = vsel %vm432, %v429, %v431
        %437 = vst [vmem:[#allocation4 + $0x20] sm:$0xf0] %v433
        %438 = vst [vmem:[#allocation4 + $0x28] sm:$0xf0] %v434
        %v439 = vld [vmem:[%s259] sm:$0xff]
        %v440 = vld [vmem:[%s259 + $0x8] sm:$0xf]
        %441 = vrot.lane.b32.xlu0 %v308, 32
        %v442 = vpop.permute.xlu0 %441
        %v443 = vrot.slane %v442, 4
        %vm444 = vcmask 261120
        %v445 = vsel %vm444, %v443, %v442
        %v448 = vmul.f32 %v439, %v445
        %v449 = vmul.f32 %v440, %v443
        %v452 = vcombine.high %v448, %v448
        %453 = vrot.lane.b32.xlu0 %v448, 96
        %v454 = vpop.permute.xlu0 %453
        %455 = vrot.lane.b32.xlu0 %v452, 96
        %v456 = vpop.permute.xlu0 %455
        %457 = vrot.lane.b32.xlu0 %v449, 96
        %v458 = vpop.permute.xlu0 %457
        %vm459 = vcmask 785408
        %v460 = vsel %vm459, %v454, %v456
        %v461 = vsel %vm459, %v456, %v458
        %464 = vst [vmem:[#allocation4 + $0x30] sm:$0xf] %v460
        %465 = vst [vmem:[#allocation4 + $0x38] sm:$0xf] %v461
        %v466 = vld [vmem:[%s259] sm:$0xff]
        %v467 = vld [vmem:[%s259 + $0x8] sm:$0xf]
        %v470 = vcombine.low %v466, %v466
        %v471 = vcombine.low %v467, %v467
        %472 = vrot.lane.b32.xlu0 %v470, 95
        %v473 = vpop.permute.xlu0 %472
        %474 = vrot.lane.b32.xlu0 %v466, 95
        %v475 = vpop.permute.xlu0 %474
        %476 = vrot.lane.b32.xlu0 %v471, 95
        %v477 = vpop.permute.xlu0 %476
        %vm478 = vcmask 777216
        %v479 = vsel %vm478, %v473, %v475
        %v480 = vsel %vm478, %v475, %v477
        %483 = vst [vmem:[#allocation4 + $0x30] sm:$0xf0] %v479
        %484 = vst [vmem:[#allocation4 + $0x38] sm:$0xf0] %v480
        %v485 = vld [vmem:[%s259] sm:$0xff]
        %v486 = vld [vmem:[%s259 + $0x8] sm:$0xf]
        %487 = vrot.lane.b32.xlu0 %v339, 34
        %v488 = vpop.permute.xlu0 %487
        %v489 = vrot.slane %v488, 4
        %vm490 = vcmask 277504
        %v491 = vsel %vm490, %v489, %v488
        %v494 = vmul.f32 %v485, %v491
        %v495 = vmul.f32 %v486, %v489
        %v498 = vcombine.high %v494, %v494
        %499 = vrot.lane.b32.xlu0 %v494, 94
        %v500 = vpop.permute.xlu0 %499
        %501 = vrot.lane.b32.xlu0 %v498, 94
        %v502 = vpop.permute.xlu0 %501
        %503 = vrot.lane.b32.xlu0 %v495, 94
        %v504 = vpop.permute.xlu0 %503
        %vm505 = vcmask 769024
        %v506 = vsel %vm505, %v500, %v502
        %v507 = vsel %vm505, %v502, %v504
        %510 = vst [vmem:[#allocation4 + $0x40] sm:$0xf] %v506
        %511 = vst [vmem:[#allocation4 + $0x48] sm:$0xf] %v507
        %v512 = vld [vmem:[%s1] sm:$0xf]
        %v513 = vld [vmem:[#allocation4] sm:$0xff]
        %v514 = vld [vmem:[#allocation4 + $0x8] sm:$0xff]
        %v515 = vld [vmem:[#allocation4 + $0x10] sm:$0xff]
        %v516 = vld [vmem:[#allocation4 + $0x18] sm:$0xff]
        %v517 = vld [vmem:[#allocation4 + $0x20] sm:$0xff]
        %v518 = vld [vmem:[#allocation4 + $0x28] sm:$0xff]
        %v519 = vld [vmem:[#allocation4 + $0x30] sm:$0xff]
        %v520 = vld [vmem:[#allocation4 + $0x38] sm:$0xff]
        %v521 = vld [vmem:[#allocation4 + $0x40] sm:$0xf]
        %v522 = vld [vmem:[#allocation4 + $0x48] sm:$0xf]
        %vm523 = vcmask 293888
        %v525 = vsel %vm523, %v512, 0
        %vm527 = vcmask 1043456
        %v529 = vsel %vm527, %v521, 0
        %v532 = vsel %vm527, %v522, 0
        %534 = vmatprep.subr.mxu0 %v514
        %535 = vmatpush1.msra.mxu0 %v513
        %536 = vmatprep.subr.mxu0 %v516
        %537 = vmatpush1.msra.mxu0 %v515
        %538 = vmatprep.subr.mxu0 %v518
        %539 = vmatpush1.msra.mxu0 %v517
        %540 = vmatprep.subr.mxu0 %v520
        %541 = vmatpush1.msra.mxu0 %v519
        %542 = vmatprep.subr.mxu0 %v532
        %543 = vmatpush1.msra.mxu0 %v529
        %544 = vmatprep.subr.mxu0 0.0
        %545 = vmatpush1.msra.mxu0 0.0
        %546 = vmatprep.subr.mxu0 0.0
        %547 = vmatpush1.msra.mxu0 0.0
        %548 = vmatprep.subr.mxu0 0.0
        %549 = vmatpush1.msra.mxu0 0.0
        %550 = vmatprep.subr.mxu0 0.0
        %551 = vmatpush1.msra.mxu0 0.0
        %552 = vmatprep.subr.mxu0 0.0
        %553 = vmatpush1.msra.mxu0 0.0
        %554 = vmatprep.subr.mxu0 0.0
        %555 = vmatpush1.msra.mxu0 0.0
        %556 = vmatprep.subr.mxu0 0.0
        %557 = vmatpush1.msra.mxu0 0.0
        %558 = vmatprep.subr.mxu0 0.0
        %559 = vmatpush1.msra.mxu0 0.0
        %560 = vmatprep.subr.mxu0 0.0
        %561 = vmatpush1.msra.mxu0 0.0
        %562 = vmatprep.subr.mxu0 0.0
        %563 = vmatpush1.msra.mxu0 0.0
        %564 = vmatprep.subr.mxu0 0.0
        %565 = vmatpush1.msra.mxu0 0.0
        %566 = vmatprep.subr.mxu0 0.0
        %567 = vmatpush1.msra.mxu0 0.0
        %568 = vmatprep.subr.mxu0 0.0
        %569 = vmatpush1.msra.mxu0 0.0
        %570 = vmatprep.subr.mxu0 0.0
        %571 = vmatpush1.msra.mxu0 0.0
        %572 = vmatprep.subr.mxu0 0.0
        %573 = vmatpush1.msra.mxu0 0.0
        %574 = vmatprep.subr.mxu0 0.0
        %575 = vmatpush1.msra.mxu0 0.0
        %576 = vmatprep.subr.mxu0 0.0
        %577 = vmatpush1.msra.mxu0 0.0
        %578 = vmatprep.subr.mxu0 0.0
        %579 = vmatpush1.msra.mxu0 0.0
        %580 = vmatprep.subr.mxu0 0.0
        %581 = vmatpush1.msra.mxu0 0.0
        %582 = vmatprep.subr.mxu0 0.0
        %583 = vmatpush1.msra.mxu0 0.0
        %584 = vmatprep.subr.mxu0 0.0
        %585 = vmatpush1.msra.mxu0 0.0
        %586 = vmatprep.subr.mxu0 0.0
        %587 = vmatpush1.msra.mxu0 0.0
        %588 = vmatprep.subr.mxu0 0.0
        %589 = vmatpush1.msra.mxu0 0.0
        %590 = vmatprep.subr.mxu0 0.0
        %591 = vmatpush1.msra.mxu0 0.0
        %592 = vmatprep.subr.mxu0 0.0
        %593 = vmatpush1.msra.mxu0 0.0
        %594 = vmatprep.subr.mxu0 0.0
        %595 = vmatpush1.msra.mxu0 0.0
        %596 = vmatprep.subr.mxu0 0.0
        %597 = vmatpush1.msra.mxu0 0.0
        %598 = vmatprep.mubr.f32.mxu0 0.0
        %599 = vmatmul.mubr.f32.gmra.mrb[0].mxu0 %v525
        %v600 = vpop.f32.mrb[0].mxu0
        %v601 = vadd.f32 0.0, %v600
        %v602 = vpop.f32.mrb[0].mxu0
        %v603 = vadd.f32 0.0, %v602
        %604 = vdwg.mxu0
        %v607 = vcombine.low %v601, %v603
        %s609 = smul.u32 %s20, 2
        %s610 = smul.addr %s609, 4
        %s611 = scalar_lea.vmem [#allocation3], %s610
        %612 = vst [vmem:[%s611] sm:$0xff] %v607
        %v613 = vld [vmem:[#allocation5] sm:$0xf]
        %v614 = vsel %vm527, %v601, 0.0
        %v615 = vsel %vm527, %v603, 0.0
        %v616 = vadd.f32 %v614, %v615
        %617 = vadd.xlane.f32.xlu0 %v616
        %v618 = vpop.xlane.xlu0 %617
        %v619 = vadd.f32 %v613, %v618
        %vm620 = vcmask 3072
        %621 = vst.msk [vmem:[#allocation5] sm:$0xf] %vm620, %v619
        %v622 = vld [vmem:[#allocation6] sm:$0xf]
        %v623 = vmul.f32 %v601, %v601
        %v624 = vmul.f32 %v603, %v603
        %v625 = vsel %vm527, %v623, 0.0
        %v626 = vsel %vm527, %v624, 0.0
        %v627 = vadd.f32 %v625, %v626
        %628 = vadd.xlane.f32.xlu0 %v627
        %v629 = vpop.xlane.xlu0 %628
        %v630 = vadd.f32 %v622, %v629
        %631 = vst.msk [vmem:[#allocation6] sm:$0xf] %vm620, %v630
      $region44: #{residual_block.1} parent=35 // pred_fallthru
        _
      %p632 = scmp.eq.s32.totalorder %s19, 1
      %p633 = pnand %p632, %p232
      %p634 = pneg %p633
      // Predicated region
      $region45: #{residual_block.1} parent=35 // pred_check
        _
      $region46: #{residual_block.1} parent=35 // pred_check_branch
        %636 = sbr.rel (%p633) target = $region48
      $region47: #{residual_block.1} parent=35 // pred_region
        %v637 = vld [vmem:[#allocation5] sm:$0xf]
        %v638 = vrcp.pop 512.0
        %v639 = vmul.f32 %v637, %v638
        %v640 = vld [vmem:[#allocation6] sm:$0xf]
        %v641 = vmul.f32 %v640, %v638
        %v642 = vmul.f32 %v639, %v639
        %v643 = vsub.f32 %v641, %v642
        %v644 = vmax.f32 %v643, 0.0
        %v645 = vld [vmem:[%s2] sm:$0xf]
        %v646 = vadd.f32 %v644, 1e-05
        %v647 = vrsqrt.pop %v646
        %v648 = vmul.f32 %v645, %v647
        %vm649 = vcmask 3072
        %650 = vst.msk [vmem:[#allocation7] sm:$0xf] %vm649, %v648
        %v651 = vld [vmem:[%s3] sm:$0xf]
        %v652 = vmul.f32 %v639, %v648
        %v653 = vsub.f32 %v651, %v652
        %654 = vst.msk [vmem:[#allocation8] sm:$0xf] %vm649, %v653
      $region48: #{residual_block.1} parent=35 // pred_fallthru
        _
      // Predicated region
      $region49: #{residual_block.1} parent=35 // pred_check
        %p655 = pneg %p632
      $region50: #{residual_block.1} parent=35 // pred_check_branch
        %657 = sbr.rel (%p655) target = $region52
      $region51: #{residual_block.1} parent=35 // pred_region
        %s658 = smul.u32 %s20, 2
        %s659 = smul.addr %s658, 4
        %s660 = scalar_lea.vmem [#allocation3], %s659
        %v661 = vld [vmem:[%s660] sm:$0xff]
        %v662 = vld [vmem:[#allocation7] sm:$0xf]
        %664 = vset.pattern.permute.xlu0 0
        %665 = vperm.xlu0 %664, %v662
        %v666 = vpop.permute.xlu0 %665
        %v668 = vunpack.c.l.s4 839922192
        %v669 = vunpack.c.0.s8 %v668
        %v670 = vlaneseq
        %v671 = vshrl.u32 %v670, 7
        %v672 = vsub.s32 %v669, %v671
        %v673 = vrot.slane %v666, %v672
        %v675 = vmul.f32 %v661, %v673
        %v676 = vld [vmem:[#allocation8] sm:$0xf]
        %678 = vset.pattern.permute.xlu0 0
        %679 = vperm.xlu0 %678, %v676
        %v680 = vpop.permute.xlu0 %679
        %v682 = vunpack.c.l.s4 839922192
        %v683 = vunpack.c.0.s8 %v682
        %v684 = vlaneseq
        %v685 = vshrl.u32 %v684, 7
        %v686 = vsub.s32 %v683, %v685
        %v687 = vrot.slane %v680, %v686
        %v689 = vadd.f32 %v675, %v687
        %v690 = vmax.f32 %v689, 0.0
        %s691 = smul.u32 %s20, 3
        %s692 = smul.addr %s691, 4
        %s693 = scalar_lea.vmem [#allocation2], %s692
        %v694 = vld [vmem:[%s693] sm:$0xff]
        %v695 = vld [vmem:[%s693 + $0x8] sm:$0xf]
        %697 = vrot.lane.b32.xlu0 %v690, 17
        %v698 = vpop.permute.xlu0 %697
        %v699 = vrot.slane %v698, 4
        %vm700 = vcmask 138240
        %v701 = vsel %vm700, %v699, %v698
        %v704 = vadd.f32 %v694, %v701
        %v705 = vadd.f32 %v695, %v699
        %708 = vrot.lane.b32.xlu0 %v704, 111
        %v709 = vpop.permute.xlu0 %708
        %710 = vrot.lane.b32.xlu0 %v705, 111
        %v711 = vpop.permute.xlu0 %710
        %v712 = vrot.slane %v709, 4
        %v713 = vrot.slane %v711, 4
        %vm714 = vcmask 1043456
        %v715 = vsel %vm714, %v712, %v713
        %vm716 = vcmask 908288
        %v717 = vsel %vm716, %v709, %v715
        %719 = vst [vmem:[%s230] sm:$0xff] %v717
      $region52: #{residual_block.1} parent=35 // pred_fallthru
        _
      %p720 = scmp.lt.s32.totalorder %s20, 1
      %s721 = scalar_select %p720, %s20, 1
      %s722 = smul.addr %s721, 2
      %s723 = smul.addr %s722, 4
      %s724 = scalar_lea.vmem %s4, %s723
      // Predicated region
      $region53: #{residual_block.1} parent=35 // pred_check
        %p725 = pneg %p140
      $region54: #{residual_block.1} parent=35 // pred_check_branch
        %727 = sbr.rel (%p725) target = $region56
      $region55: #{residual_block.1} parent=35 // pred_region
        _
      $region56: #{residual_block.1} parent=35 // pred_fallthru
        _
    $region36: #{residual_block.1} parent=5 // pred_fallthru
      _
    %p728 = scmp.le.s32.totalorder 2, %s10
    // Predicated region
    $region57: #{residual_block.1} parent=5 // pred_check
      %p729 = pneg %p728
    $region58: #{residual_block.1} parent=5 // pred_check_branch
      %731 = sbr.rel (%p729) target = $region60
    $region59: #{residual_block.1} parent=5 // pred_region
      %s732 = ssub.s32 %s10, 2
      // Predicated region
      $region61: #{residual_block.1} parent=59 // pred_check
        %p733 = pneg %p146
      $region62: #{residual_block.1} parent=59 // pred_check_branch
        %735 = sbr.rel (%p733) target = $region64
      $region63: #{residual_block.1} parent=59 // pred_region
        %p736 = scmp.lt.s32.totalorder %s22, 1
        %s737 = scalar_select %p736, %s22, 1
        %s738 = smul.addr %s737, 2
        %s739 = smul.addr %s738, 4
        %s740 = scalar_lea.vmem %s4, %s739
      $region64: #{residual_block.1} parent=59 // pred_fallthru
        _
    $region60: #{residual_block.1} parent=5 // pred_fallthru
      _
  $region6: #{residual_block.1} parent=0 // loop_footer
    %s14 = sadd.s32 1, %s10
  $region7: #{residual_block.1} parent=0 // loop_footer_branch
    %9 = sbr.rel target = $region3
  $region8: #{residual_block.1} parent=0 // loop_exit
    _

</llo_original>
